<compile_context>
chip_gen: v7x
topology: tpu7x:2x2x1
jax: 0.10.0
libtpu: 0.0.40
codegen_flags: <defaults>
</compile_context>

<pallas_src>
import functools

import jax
import jax.numpy as jnp
import numpy as np
from jax.experimental import pallas as pl
from jax.experimental.pallas import tpu as pltpu


def _round_up(x: int, m: int) -> int:
    return ((x + m - 1) // m) * m


def _choose_tile_t(T: int, L: int, itemsize: int, max_tile_t: int = 8192,
                   vmem_budget_bytes: int = 12 * 1024 * 1024) -> int:
    """Largest multiple-of-128 time tile whose VMEM footprint fits the budget.

    Accounts for the lane padding of the (tile_t, L) input block to
    round_up(L, 128) lanes, double-buffering of input and output, and the
    sublane padding (1 -> 8) of the (1, tile_t) int32 output block.
    """
    lanes = _round_up(L, 128)
    bytes_per_t = 2 * lanes * itemsize + 2 * 8 * 4   # dbl-buf input + dbl-buf output
    by_vmem = max(128, vmem_budget_bytes // bytes_per_t)
    tile = min(max_tile_t, by_vmem, _round_up(T, 128))
    return max(128, (tile // 128) * 128)


def _greedy_argmax_kernel(em_ref, idx_ref):
    """One (tile_t, L) tile of timesteps -> (1, tile_t) int32 argmax indices."""
    # Cast in-vreg (keeps HBM traffic at the native dtype; v5e has no bf16 VALU).
    em = em_ref[...].astype(jnp.float32)               # (tile_t, L)
    tile_t, num_label = em.shape

    # Put time on the lane axis: one XLU transpose makes every later result a
    # lane-dense (1, tile_t) row.
    emt = em.T                                         # (L, tile_t)

    # First-occurrence argmax over labels (sublane axis), like torch.argmax.
    max_v = jnp.max(emt, axis=0, keepdims=True)        # (1, tile_t)
    lab = jax.lax.broadcasted_iota(jnp.int32, (num_label, tile_t), 0)
    idx = jnp.min(jnp.where(emt == max_v, lab, jnp.int32(num_label)),
                  axis=0, keepdims=True)               # (1, tile_t)
    idx = jnp.minimum(idx, jnp.int32(num_label - 1))   # NaN-safe: stay in range

    idx_ref[...] = idx                                 # single unmasked store


@functools.partial(jax.jit, static_argnames=("blank", "max_tile_t"))
def greedy_ctc_indices(emission: jax.Array, blank: int = 0,
                       max_tile_t: int = 8192):
    """Runs the Pallas kernel. Returns (indices[T], keep_mask[T]) int32/bool."""
    T, L = emission.shape
    tile_t = _choose_tile_t(T, L, emission.dtype.itemsize, max_tile_t)
    n_tiles = pl.cdiv(T, tile_t)

    idx2d = pl.pallas_call(
        _greedy_argmax_kernel,
        out_shape=jax.ShapeDtypeStruct((1, T), jnp.int32),
        grid=(n_tiles,),
        in_specs=[pl.BlockSpec((tile_t, L), lambda i: (i, 0))],
        out_specs=pl.BlockSpec((1, tile_t), lambda i: (0, i)),
        compiler_params=pltpu.CompilerParams(
            dimension_semantics=("parallel",),          # no cross-tile carry
            vmem_limit_bytes=32 * 1024 * 1024),
    )(emission)

    idx = idx2d[0]
    # unique_consecutive + blank removal as a tiny fused XLA epilogue.
    prev = jnp.concatenate([jnp.full((1,), -1, jnp.int32), idx[:-1]])
    keep = (idx != jnp.int32(blank)) & (idx != prev)
    return idx, keep


class GreedyCTCDecoder:
    """JAX/Pallas equivalent of the PyTorch GreedyCTCDecoder module."""

    def __init__(self, labels, blank: int = 0, max_tile_t: int = 8192):
        self.labels = labels
        self.blank = blank
        self.max_tile_t = max_tile_t

    def __call__(self, emission: jax.Array) -> str:
        idx, keep = greedy_ctc_indices(emission, blank=self.blank,
                                       max_tile_t=self.max_tile_t)
        jax.block_until_ready((idx, keep))
        idx_h = np.asarray(jax.device_get(idx))
        keep_h = np.asarray(jax.device_get(keep)).astype(bool)
        # Host-only epilogue: label lookup + string join (no array equivalent).
        return ''.join(self.labels[int(i)] for i in idx_h[keep_h])


def _reference_decode(emission_np: np.ndarray, labels, blank: int) -> str:
    """Pure-Python reference mirroring the PyTorch module."""
    idx = emission_np.argmax(axis=1)
    uniq = [int(v) for j, v in enumerate(idx) if j == 0 or v != idx[j - 1]]
    return ''.join(labels[v] for v in uniq if v != blank)


if __name__ == "__main__":
    labels = "-abcdefghijklmnopqrstuvwxyz '.,?"   # 32 labels, blank = index 0
    L = len(labels)
    assert L == 32

    key = jax.random.PRNGKey(0)
    k1, k2, k3 = jax.random.split(key, 3)

    # Small primary example matching the module: num_seq=8, num_label=32.
    T = 8
    emission = jax.random.normal(k1, (T, L), dtype=jnp.float32)

    decoder = GreedyCTCDecoder(labels, blank=0)
    transcript = decoder(emission)
    ref = _reference_decode(np.asarray(jax.device_get(emission)), labels, 0)
    assert transcript == ref, (transcript, ref)

    # Kernel-output check against a pure-JAX argmax reference.
    idx, keep = greedy_ctc_indices(emission, blank=0)
    jax.block_until_ready((idx, keep))
    ref_idx = jax.device_get(jnp.argmax(emission, axis=1).astype(jnp.int32))
    assert (np.asarray(jax.device_get(idx)) == np.asarray(ref_idx)).all()

    # Multi-tile case (small forced tile) exercising the parallel grid and the
    # XLA-side duplicate-collapse epilogue across tile boundaries.
    T2 = 384
    ids = jax.random.randint(k2, (T2,), 0, 5)            # many repeats / blanks
    em2 = (jax.nn.one_hot(ids, L, dtype=jnp.float32) * 5.0
           + 0.01 * jax.random.normal(k3, (T2, L), dtype=jnp.float32))
    decoder2 = GreedyCTCDecoder(labels, blank=0, max_tile_t=128)   # grid = (3,)
    transcript2 = decoder2(em2)
    ref2 = _reference_decode(np.asarray(jax.device_get(em2)), labels, 0)
    assert transcript2 == ref2, (transcript2, ref2)

    # Ragged case (T not a multiple of the tile): exercises the no-pad path
    # where the last input block is partially out of bounds and the last
    # output block's store is masked.
    T3 = 200
    em3 = em2[:T3]
    decoder3 = GreedyCTCDecoder(labels, blank=0, max_tile_t=128)   # grid = (2,)
    transcript3 = decoder3(em3)
    ref3 = _reference_decode(np.asarray(jax.device_get(em3)), labels, 0)
    assert transcript3 == ref3, (transcript3, ref3)

    # bf16 emissions: HBM bytes halved, cast to f32 happens in-vreg inside the
    # kernel (v5e-safe). Reference uses the same bf16-rounded values.
    em4 = em2.astype(jnp.bfloat16)
    transcript4 = GreedyCTCDecoder(labels, blank=0, max_tile_t=128)(em4)
    ref4 = _reference_decode(
        np.asarray(jax.device_get(em4.astype(jnp.float32))), labels, 0)
    assert transcript4 == ref4, (transcript4, ref4)

    print("KERNEL_OK")
</pallas_src>

<mosaic_0001>
module attributes {stable_mosaic.version = 11 : i64} {
  func.func @_greedy_argmax_kernel(%arg0: i32, %arg1: memref<128x32xf32, #tpu.memory_space<vmem>>, %arg2: memref<1x128xi32, #tpu.memory_space<vmem>>) attributes {dimension_semantics = [#tpu.dimension_semantics<parallel>], iteration_bounds = array<i64: 1>, scalar_prefetch = 0 : i64, scratch_operands = 0 : i64, tpu.core_type = #tpu.core_type<tc>, window_params = [{transform_indices = @transform_0, window_bounds = array<i64: 128, 32>}, {transform_indices = @transform_1, window_bounds = array<i64: 1, 128>}]} {
    %c0 = arith.constant 0 : index
    %c0_0 = arith.constant 0 : index
    %0 = vector.load %arg1[%c0, %c0_0] : memref<128x32xf32, #tpu.memory_space<vmem>>, vector<128x32xf32>
    %1 = tpu.transpose %0, [1, 0] : vector<128x32xf32> -> vector<32x128xf32>
    %cst = arith.constant dense<0xFF800000> : vector<128xf32>
    %2 = vector.multi_reduction <maximumf>, %1, %cst [0] : vector<32x128xf32> to vector<128xf32>
    %3 = vector.shape_cast %2 : vector<128xf32> to vector<1x128xf32>
    %4 = tpu.iota {dimensions = array<i32: 0>} : vector<32x128xi32>
    %5 = vector.broadcast %3 : vector<1x128xf32> to vector<32x128xf32>
    %6 = arith.cmpf oeq, %1, %5 : vector<32x128xf32>
    %c32_i32 = arith.constant 32 : i32
    %7 = vector.broadcast %c32_i32 : i32 to vector<32x128xi32>
    %8 = arith.select %6, %4, %7 : vector<32x128xi1>, vector<32x128xi32>
    %cst_1 = arith.constant dense<2147483647> : vector<128xi32>
    %9 = vector.multi_reduction <minsi>, %8, %cst_1 [0] : vector<32x128xi32> to vector<128xi32>
    %10 = vector.shape_cast %9 : vector<128xi32> to vector<1x128xi32>
    %c31_i32 = arith.constant 31 : i32
    %11 = vector.broadcast %c31_i32 : i32 to vector<1x128xi32>
    %12 = arith.minsi %10, %11 : vector<1x128xi32>
    %c0_2 = arith.constant 0 : index
    %c0_3 = arith.constant 0 : index
    %13 = vector.load %arg2[%c0_2, %c0_3] : memref<1x128xi32, #tpu.memory_space<vmem>>, vector<1x128xi32>
    tpu.vector_store %arg2[%c0_2, %c0_3], %12 {strides = array<i32>} : memref<1x128xi32, #tpu.memory_space<vmem>>, vector<1x128xi32>,
    return
  }
  func.func @transform_0(%arg0: i32) -> (i32, i32) {
    %c0_i32 = arith.constant 0 : i32
    %c0_i32_0 = arith.constant 0 : i32
    return %arg0, %c0_i32 : i32, i32
  }
  func.func @transform_1(%arg0: i32) -> (i32, i32) {
    %c0_i32 = arith.constant 0 : i32
    %c0_i32_0 = arith.constant 0 : i32
    return %c0_i32, %arg0 : i32, i32
  }
}

</mosaic_0001>

<llo_original>
// kernel: greedy_ctc_indices.1
$region0: #{greedy_ctc_indices.1}
  #allocation0 [shape = 'u32[]', space=smem, size = 0x4, offset = 0x4, fixed_abs, tag = 'smem constant byte address 0x4 - core index']
  #allocation1 [shape = 'u32[144,128]{1,0:T(1,128)}', space=vmem, size = 0x12000, scoped, tag = 'internal scratch']
  %s0 = inlined_call_operand.hbm [shape: f32[8,32], index: 0, kind: input, shape index: {}]
  %s1 = inlined_call_operand.vmem [shape: s32[1,8], index: 1, kind: output, shape index: {}]
  %s2 = sld [smem:[#allocation0]]
  $region18: #{greedy_ctc_indices.1} parent=0
    _
  %s4 = ssub.s32 1, %s2
  %s5 = scalar_select 0, %s4, %s2
  $region1: #{greedy_ctc_indices.1} parent=0
    #allocation2 [shape = 'u8[65536]{0}', space=vmem, size = 0x10000, scoped, tag = 'input window, operand 0, single buffered']
    #allocation3 [shape = 's32[1]{0}', space=sflag, size = 0x4, scoped, tag = 'scoped memory for greedy_ctc_indices.1']
    %6 = vsyncpa [#allocation3], 0
    // Predicated region
    $region2: #{greedy_ctc_indices.1} parent=1 // pred_check
      _
    $region3: #{greedy_ctc_indices.1} parent=1 // pred_check_branch
      %8 = sbr.rel (0) target = $region5
    $region4: #{greedy_ctc_indices.1} parent=1 // pred_region
      %s10 = ssub.s32 2048, 128
      %11 = vsyncadd [#allocation3], %s10
      %s12 = sshll.u32 [#allocation2], 4
      %s13 = int_to_ptr.vmem [resolvable:$true] %s12
      %18 = dma.hbm_to_vmem [thread:$0]  %s0, 128, %s13, [#allocation3], 128, 128, 8
    $region5: #{greedy_ctc_indices.1} parent=1 // pred_fallthru
      _
    // Predicated region
    $region6: #{greedy_ctc_indices.1} parent=1 // pred_check
      _
    $region7: #{greedy_ctc_indices.1} parent=1 // pred_check_branch
      %20 = sbr.rel (0) target = $region9
    $region8: #{greedy_ctc_indices.1} parent=1 // pred_region
      %21 = dma.done [#allocation3], 2048
    $region9: #{greedy_ctc_indices.1} parent=1 // pred_fallthru
      _
    %v22 = vld [vmem:[#allocation2] sm:$0xff]
    %v23 = vld [vmem:[#allocation2 + $0x8] sm:$0xff]
    %v24 = vld [vmem:[#allocation2 + $0x10] sm:$0xff]
    %v25 = vld [vmem:[#allocation2 + $0x18] sm:$0xff]
    %v26 = vld [vmem:[#allocation2 + $0x20] sm:$0xff]
    %v27 = vld [vmem:[#allocation2 + $0x28] sm:$0xff]
    %v28 = vld [vmem:[#allocation2 + $0x30] sm:$0xff]
    %v29 = vld [vmem:[#allocation2 + $0x38] sm:$0xff]
    %v30 = vld [vmem:[#allocation2 + $0x40] sm:$0xff]
    %v31 = vld [vmem:[#allocation2 + $0x48] sm:$0xff]
    %v32 = vld [vmem:[#allocation2 + $0x50] sm:$0xff]
    %v33 = vld [vmem:[#allocation2 + $0x58] sm:$0xff]
    %v34 = vld [vmem:[#allocation2 + $0x60] sm:$0xff]
    %v35 = vld [vmem:[#allocation2 + $0x68] sm:$0xff]
    %v36 = vld [vmem:[#allocation2 + $0x70] sm:$0xff]
    %v37 = vld [vmem:[#allocation2 + $0x78] sm:$0xff]
    %38 = vxpose.xlu0.b32.start [1/16] %v22, 128
    %39 = vxpose.xlu0.b32.cont [2/16] %v23, 128
    %40 = vxpose.xlu0.b32.cont [3/16] %v24, 128
    %41 = vxpose.xlu0.b32.cont [4/16] %v25, 128
    %42 = vxpose.xlu0.b32.cont [5/16] %v26, 128
    %43 = vxpose.xlu0.b32.cont [6/16] %v27, 128
    %44 = vxpose.xlu0.b32.cont [7/16] %v28, 128
    %45 = vxpose.xlu0.b32.cont [8/16] %v29, 128
    %46 = vxpose.xlu0.b32.cont [9/16] %v30, 128
    %47 = vxpose.xlu0.b32.cont [10/16] %v31, 128
    %48 = vxpose.xlu0.b32.cont [11/16] %v32, 128
    %49 = vxpose.xlu0.b32.cont [12/16] %v33, 128
    %50 = vxpose.xlu0.b32.cont [13/16] %v34, 128
    %51 = vxpose.xlu0.b32.cont [14/16] %v35, 128
    %52 = vxpose.xlu0.b32.cont [15/16] %v36, 128
    %53 = vxpose.xlu0.b32.end [16/16] %v37, 128
    %v54 = vpop.trf.xlu0
    %v55 = vpop.trf.xlu0
    %v56 = vpop.trf.xlu0
    %v57 = vpop.trf.xlu0
    %v58 = vpop.trf.xlu0
    %v59 = vpop.trf.xlu0
    %v60 = vpop.trf.xlu0
    %v61 = vpop.trf.xlu0
    %v62 = vpop.trf.xlu0
    %v63 = vpop.trf.xlu0
    %v64 = vpop.trf.xlu0
    %v65 = vpop.trf.xlu0
    %v66 = vpop.trf.xlu0
    %v67 = vpop.trf.xlu0
    %v68 = vpop.trf.xlu0
    %v69 = vpop.trf.xlu0
    %v70 = vmax.f32 %v54, %v55
    %v71 = vmax.f32 %v56, %v57
    %v72 = vmax.f32 %v70, %v71
    %v73 = vrot.slane %v72, 4
    %v74 = vmax.f32 %v72, %v73
    %v75 = vrot.slane %v74, 2
    %v76 = vmax.f32 %v74, %v75
    %v77 = vrot.slane %v76, 1
    %v78 = vmax.f32 %v76, %v77
    %v79 = vlaneseq
    %v80 = vshrl.u32 %v79, 7
    %v81 = vadd.s32 %v80, 8
    %v82 = vadd.s32 %v80, 16
    %v83 = vadd.s32 %v80, 24
    %vm84 = vcmp.eq.f32.partialorder %v54, %v78
    %vm85 = vcmp.eq.f32.partialorder %v55, %v78
    %vm86 = vcmp.eq.f32.partialorder %v56, %v78
    %vm87 = vcmp.eq.f32.partialorder %v57, %v78
    %v88 = vsel %vm84, %v80, 32
    %v89 = vsel %vm85, %v81, 32
    %v90 = vsel %vm86, %v82, 32
    %v91 = vsel %vm87, %v83, 32
    %vm92 = vcmp.lt.s32.totalorder %v88, %v89
    %v93 = vsel %vm92, %v88, %v89
    %vm94 = vcmp.lt.s32.totalorder %v90, %v91
    %v95 = vsel %vm94, %v90, %v91
    %vm96 = vcmp.lt.s32.totalorder %v93, %v95
    %v97 = vsel %vm96, %v93, %v95
    %v98 = vrot.slane %v97, 4
    %vm99 = vcmp.lt.s32.totalorder %v97, %v98
    %v100 = vsel %vm99, %v97, %v98
    %v101 = vrot.slane %v100, 2
    %vm102 = vcmp.lt.s32.totalorder %v100, %v101
    %v103 = vsel %vm102, %v100, %v101
    %v104 = vrot.slane %v103, 1
    %vm105 = vcmp.lt.s32.totalorder %v103, %v104
    %v106 = vsel %vm105, %v103, %v104
    %vm107 = vcmp.lt.s32.totalorder %v106, 31
    %v108 = vsel %vm107, %v106, 31
    %109 = vst [vmem:[%s1] sm:$0x1] %v108
    // Predicated region
    $region10: #{greedy_ctc_indices.1} parent=1 // pred_check
      _
    $region11: #{greedy_ctc_indices.1} parent=1 // pred_check_branch
      %111 = sbr.rel (0) target = $region13
    $region12: #{greedy_ctc_indices.1} parent=1 // pred_region
      _
    $region13: #{greedy_ctc_indices.1} parent=1 // pred_fallthru
      _
    // Predicated region
    $region14: #{greedy_ctc_indices.1} parent=1 // pred_check
      _
    $region15: #{greedy_ctc_indices.1} parent=1 // pred_check_branch
      %113 = sbr.rel (0) target = $region17
    $region16: #{greedy_ctc_indices.1} parent=1 // pred_region
      _
    $region17: #{greedy_ctc_indices.1} parent=1 // pred_fallthru
      _
    %114 = vsyncpa [#allocation3], 1

</llo_original>
